<compile_context>
chip_gen: v7x
topology: tpu7x:2x2x1
jax: 0.10.0
libtpu: 0.0.40
codegen_flags: <defaults>
</compile_context>

<pallas_src>
import numpy as np
import jax
import jax.numpy as jnp
from jax import lax
from jax.experimental import pallas as pl
from jax.experimental.pallas import tpu as pltpu

LAMBDA_VAL = 0.1   # module default lambda_val
L1_COEFF = 0.01
_LANE = 128


def _frl_kernel(tgt_ref, logits_ref, feats_ref, attn_ref,
                cs_ref, cnt_ref, ce_ref, f2_ref, l1_ref):
    """One lane-dense batch tile (batch on lanes, features on sublanes)."""
    j = pl.program_id(1)

    @pl.when(j == 0)
    def _init():
        cs_ref[...] = jnp.zeros_like(cs_ref)
        cnt_ref[...] = jnp.zeros_like(cnt_ref)
        ce_ref[...] = jnp.zeros_like(ce_ref)
        f2_ref[...] = jnp.zeros_like(f2_ref)
        l1_ref[...] = jnp.zeros_like(l1_ref)

    logits = logits_ref[...].astype(jnp.float32)   # [C, TB]
    feats = feats_ref[...].astype(jnp.float32)     # [D, TB]
    attn = attn_ref[...].astype(jnp.float32)       # [A, TB]
    tgt = tgt_ref[...]                             # [1, TB] int32 (pad cols = -1)

    n_cls, tb = logits.shape

    # pad columns carry target=-1 and zero data -> mask handles CE only
    valid = (tgt >= 0).astype(jnp.float32)                                 # [1, TB]
    onehot = (lax.broadcasted_iota(jnp.int32, (n_cls, tb), 0) == tgt
              ).astype(jnp.float32)                                        # [C, TB]

    # ---- cross-entropy per column: logsumexp - target logit (sublane reduces)
    col_max = jnp.max(logits, axis=0, keepdims=True)                       # [1, TB]
    lse = jnp.log(jnp.sum(jnp.exp(logits - col_max), axis=0,
                          keepdims=True)) + col_max                        # [1, TB]
    tgt_logit = jnp.sum(logits * onehot, axis=0, keepdims=True)            # [1, TB]
    ce_ref[...] += jnp.sum((lse - tgt_logit) * valid, axis=1, keepdims=True)

    # ---- center-loss partials: class sums (A·Bᵀ, contract lane dims), counts,
    # ---- and sum ||f||^2
    cs_ref[...] += lax.dot_general(
        onehot, feats, dimension_numbers=(((1,), (1,)), ((), ())),
        preferred_element_type=jnp.float32)                                # [C, D]
    cnt_ref[...] += jnp.sum(onehot, axis=1, keepdims=True)                 # [C, 1]
    f2_ref[...] += jnp.sum(jnp.sum(feats * feats, axis=1, keepdims=True),
                           axis=0, keepdims=True)                          # [1, 1]

    # ---- L1 partial
    l1_ref[...] += jnp.sum(jnp.sum(jnp.abs(attn), axis=1, keepdims=True),
                           axis=0, keepdims=True)                          # [1, 1]


def _round_up(x, m):
    return (x + m - 1) // m * m


def feature_recalibration_loss(outputs, features, targets,
                               attention_weights=None,
                               lambda_val=LAMBDA_VAL,
                               block_b=4096, num_cores=2):
    """Returns (total_loss, ce_loss, center_loss, l1_loss) as float32 scalars."""
    outputs = jnp.asarray(outputs)
    B, C = outputs.shape
    features = jnp.asarray(features).reshape(B, -1)
    D = features.shape[1]
    if attention_weights is None:
        attention_weights = jnp.zeros((B, 1), jnp.float32)   # l1 term -> 0
    attention_weights = jnp.asarray(attention_weights).reshape(B, -1)
    A = attention_weights.shape[1]
    targets = jnp.asarray(targets).astype(jnp.int32)

    # ---- tile geometry: batch along lanes, tiles of tb columns ----
    block_b = max(_LANE, _round_up(block_b, _LANE))
    # cap the double-buffered input working set (~24 MiB) so v7x VMEM is safe
    rows = 8 + _round_up(C, 8) + _round_up(D, 8) + _round_up(A, 8)
    max_tb = max(_LANE, (24 * 1024 * 1024 // (rows * 4 * 2)) // _LANE * _LANE)
    tb = min(block_b, max_tb, _round_up(B, _LANE))

    nt_total = -(-B // tb)                           # total batch tiles
    nc = num_cores if nt_total >= num_cores else 1   # 2-TC split (v7x); serial elsewhere
    npc = -(-nt_total // nc)                         # tiles per core
    b_pad = nc * npc * tb
    pad = b_pad - B

    # feature-major (lane-dense) repack; padded columns are zero with target=-1
    logits_t = jnp.pad(outputs.T, ((0, 0), (0, pad)))
    feats_t = jnp.pad(features.T, ((0, 0), (0, pad)))
    attn_t = jnp.pad(attention_weights.T, ((0, 0), (0, pad)))
    tgt_row = jnp.pad(targets, (0, pad), constant_values=-1).reshape(1, b_pad)

    col_map = lambda c, j: (0, c * npc + j)   # streamed inputs
    acc_map = lambda c, j: (c, 0, 0)          # per-core resident accumulators

    cs_p, cnt_p, ce_p, f2_p, l1_p = pl.pallas_call(
        _frl_kernel,
        out_shape=(
            jax.ShapeDtypeStruct((nc, C, D), jnp.float32),  # class feature sums
            jax.ShapeDtypeStruct((nc, C, 1), jnp.float32),  # class counts
            jax.ShapeDtypeStruct((nc, 1, 1), jnp.float32),  # sum of CE rows
            jax.ShapeDtypeStruct((nc, 1, 1), jnp.float32),  # sum ||f||^2
            jax.ShapeDtypeStruct((nc, 1, 1), jnp.float32),  # sum |attn|
        ),
        grid_spec=pltpu.PrefetchScalarGridSpec(
            num_scalar_prefetch=0,
            grid=(nc, npc),
            in_specs=[
                pl.BlockSpec((1, tb), col_map),   # targets (lane layout)
                pl.BlockSpec((C, tb), col_map),   # logits^T
                pl.BlockSpec((D, tb), col_map),   # features^T
                pl.BlockSpec((A, tb), col_map),   # attention^T
            ],
            out_specs=[
                pl.BlockSpec((None, C, D), acc_map),
                pl.BlockSpec((None, C, 1), acc_map),
                pl.BlockSpec((None, 1, 1), acc_map),
                pl.BlockSpec((None, 1, 1), acc_map),
                pl.BlockSpec((None, 1, 1), acc_map),
            ],
        ),
        compiler_params=pltpu.CompilerParams(
            dimension_semantics=("parallel", "arbitrary")),
    )(tgt_row, logits_t, feats_t, attn_t)

    # ---- tiny wrapper-side combine of the per-core partials ----
    inv_b = jnp.float32(1.0 / B)
    cs = jnp.sum(cs_p, axis=0)                       # [C, D]
    cnt = jnp.sum(cnt_p, axis=0)                     # [C, 1]
    ce = jnp.sum(ce_p) * inv_b
    f2 = jnp.sum(f2_p)
    per_class = jnp.sum(cs * cs, axis=1, keepdims=True) / jnp.maximum(cnt, 1.0)
    # TODO(synk): the sum-of-squares identity can lose precision when per-class
    # feature means are large vs. within-class variance; a two-pass
    # (mean-subtracted) variant would be needed for tighter tolerances.
    center = (f2 - jnp.sum(per_class)) * inv_b
    l1 = jnp.sum(l1_p) * jnp.float32(1.0 / (B * A))
    total = ce + jnp.float32(lambda_val) * center + jnp.float32(L1_COEFF) * l1
    return total, ce, center, l1


def _reference_numpy(outputs, features, targets, attention_weights,
                     lambda_val=LAMBDA_VAL):
    """float64 numpy reference mirroring the PyTorch module."""
    logits = np.asarray(outputs, np.float64)
    B = logits.shape[0]
    feats = np.asarray(features, np.float64).reshape(B, -1)
    tgt = np.asarray(targets)
    attn = np.asarray(attention_weights, np.float64)

    m = logits.max(axis=1, keepdims=True)
    lse = np.log(np.exp(logits - m).sum(axis=1, keepdims=True)) + m
    ce = float(np.mean(lse[:, 0] - logits[np.arange(B), tgt]))

    centers = {}
    for c in np.unique(tgt):
        centers[int(c)] = feats[tgt == c].mean(axis=0)
    center = 0.0
    for i in range(B):
        d = feats[i] - centers[int(tgt[i])]
        center += float(np.sum(d * d))
    center /= B

    l1 = float(np.mean(np.abs(attn)))
    total = ce + lambda_val * center + L1_COEFF * l1
    return total, ce, center, l1


if __name__ == "__main__":
    key = jax.random.PRNGKey(0)

    def run_case(B, C, D, A, block_b):
        k1, k2, k3, k4 = jax.random.split(
            jax.random.fold_in(key, B * 1000 + block_b), 4)
        outputs = jax.random.normal(k1, (B, C), jnp.float32)
        features = jax.random.normal(k2, (B, D), jnp.float32)
        targets = jax.random.randint(k3, (B,), 0, C, jnp.int32)
        attn = jax.random.normal(k4, (B, A), jnp.float32)

        got = feature_recalibration_loss(outputs, features, targets, attn,
                                         block_b=block_b)
        got = jax.block_until_ready(got)
        ref = _reference_numpy(outputs, features, targets, attn)
        for g, r in zip(got, ref):
            assert np.allclose(np.asarray(g), r, rtol=5e-4, atol=1e-5), \
                (float(g), r, B, block_b)

    # small single-tile case (batch=8, 7 expression classes, 32-dim features)
    run_case(B=8, C=7, D=32, A=32, block_b=4096)
    # multi-tile case: 2-core grid + padded/masked tail (grid (2, 2), tb=128)
    run_case(B=300, C=7, D=32, A=16, block_b=128)

    print("KERNEL_OK")
</pallas_src>

<mosaic_0001>
module attributes {stable_mosaic.version = 11 : i64} {
  func.func @_frl_kernel(%arg0: i32, %arg1: i32, %arg2: memref<1x128xi32, #tpu.memory_space<vmem>>, %arg3: memref<7x128xf32, #tpu.memory_space<vmem>>, %arg4: memref<32x128xf32, #tpu.memory_space<vmem>>, %arg5: memref<32x128xf32, #tpu.memory_space<vmem>>, %arg6: memref<1x7x32xf32, #tpu.memory_space<vmem>>, %arg7: memref<1x7x1xf32, #tpu.memory_space<vmem>>, %arg8: memref<1x1x1xf32, #tpu.memory_space<vmem>>, %arg9: memref<1x1x1xf32, #tpu.memory_space<vmem>>, %arg10: memref<1x1x1xf32, #tpu.memory_space<vmem>>) attributes {dimension_semantics = [#tpu.dimension_semantics<parallel>, #tpu.dimension_semantics<arbitrary>], iteration_bounds = array<i64: 1, 1>, scalar_prefetch = 0 : i64, scratch_operands = 0 : i64, tpu.core_type = #tpu.core_type<tc>, window_params = [{transform_indices = @transform_0, window_bounds = array<i64: 1, 128>}, {transform_indices = @transform_1, window_bounds = array<i64: 7, 128>}, {transform_indices = @transform_2, window_bounds = array<i64: 32, 128>}, {transform_indices = @transform_3, window_bounds = array<i64: 32, 128>}, {transform_indices = @transform_4, window_bounds = array<i64: 1, 7, 32>}, {transform_indices = @transform_5, window_bounds = array<i64: 1, 7, 1>}, {transform_indices = @transform_6, window_bounds = array<i64: 1, 1, 1>}, {transform_indices = @transform_7, window_bounds = array<i64: 1, 1, 1>}, {transform_indices = @transform_8, window_bounds = array<i64: 1, 1, 1>}]} {
    %c0_i32 = arith.constant 0 : i32
    %0 = arith.cmpi eq, %arg1, %c0_i32 : i32
    %1 = arith.extui %0 : i1 to i32
    %c0_i32_0 = arith.constant 0 : i32
    %2 = arith.cmpi ne, %1, %c0_i32_0 : i32
    scf.if %2 {
      %cst_48 = arith.constant 0.000000e+00 : f32
      %75 = vector.broadcast %cst_48 : f32 to vector<7x32xf32>
      %c0_49 = arith.constant 0 : index
      %c0_50 = arith.constant 0 : index
      %c0_51 = arith.constant 0 : index
      %76 = vector.load %arg6[%c0_49, %c0_50, %c0_51] : memref<1x7x32xf32, #tpu.memory_space<vmem>>, vector<1x7x32xf32>
      %77 = vector.shape_cast %76 : vector<1x7x32xf32> to vector<7x32xf32>
      %78 = vector.shape_cast %75 : vector<7x32xf32> to vector<1x7x32xf32>
      tpu.vector_store %arg6[%c0_49, %c0_50, %c0_51], %78 {strides = array<i32>} : memref<1x7x32xf32, #tpu.memory_space<vmem>>, vector<1x7x32xf32>,
      %cst_52 = arith.constant 0.000000e+00 : f32
      %79 = vector.broadcast %cst_52 : f32 to vector<7x1xf32>
      %c0_53 = arith.constant 0 : index
      %c0_54 = arith.constant 0 : index
      %c0_55 = arith.constant 0 : index
      %80 = vector.load %arg7[%c0_53, %c0_54, %c0_55] : memref<1x7x1xf32, #tpu.memory_space<vmem>>, vector<1x7x1xf32>
      %81 = vector.shape_cast %80 : vector<1x7x1xf32> to vector<7x1xf32>
      %82 = vector.shape_cast %79 : vector<7x1xf32> to vector<1x7x1xf32>
      tpu.vector_store %arg7[%c0_53, %c0_54, %c0_55], %82 {strides = array<i32>} : memref<1x7x1xf32, #tpu.memory_space<vmem>>, vector<1x7x1xf32>,
      %cst_56 = arith.constant 0.000000e+00 : f32
      %83 = vector.broadcast %cst_56 : f32 to vector<1x1xf32>
      %c0_57 = arith.constant 0 : index
      %c0_58 = arith.constant 0 : index
      %c0_59 = arith.constant 0 : index
      %84 = vector.load %arg8[%c0_57, %c0_58, %c0_59] : memref<1x1x1xf32, #tpu.memory_space<vmem>>, vector<1x1x1xf32>
      %85 = vector.shape_cast %84 : vector<1x1x1xf32> to vector<1x1xf32>
      %86 = vector.shape_cast %83 : vector<1x1xf32> to vector<1x1x1xf32>
      tpu.vector_store %arg8[%c0_57, %c0_58, %c0_59], %86 {strides = array<i32>} : memref<1x1x1xf32, #tpu.memory_space<vmem>>, vector<1x1x1xf32>,
      %cst_60 = arith.constant 0.000000e+00 : f32
      %87 = vector.broadcast %cst_60 : f32 to vector<1x1xf32>
      %c0_61 = arith.constant 0 : index
      %c0_62 = arith.constant 0 : index
      %c0_63 = arith.constant 0 : index
      %88 = vector.load %arg9[%c0_61, %c0_62, %c0_63] : memref<1x1x1xf32, #tpu.memory_space<vmem>>, vector<1x1x1xf32>
      %89 = vector.shape_cast %88 : vector<1x1x1xf32> to vector<1x1xf32>
      %90 = vector.shape_cast %87 : vector<1x1xf32> to vector<1x1x1xf32>
      tpu.vector_store %arg9[%c0_61, %c0_62, %c0_63], %90 {strides = array<i32>} : memref<1x1x1xf32, #tpu.memory_space<vmem>>, vector<1x1x1xf32>,
      %cst_64 = arith.constant 0.000000e+00 : f32
      %91 = vector.broadcast %cst_64 : f32 to vector<1x1xf32>
      %c0_65 = arith.constant 0 : index
      %c0_66 = arith.constant 0 : index
      %c0_67 = arith.constant 0 : index
      %92 = vector.load %arg10[%c0_65, %c0_66, %c0_67] : memref<1x1x1xf32, #tpu.memory_space<vmem>>, vector<1x1x1xf32>
      %93 = vector.shape_cast %92 : vector<1x1x1xf32> to vector<1x1xf32>
      %94 = vector.shape_cast %91 : vector<1x1xf32> to vector<1x1x1xf32>
      tpu.vector_store %arg10[%c0_65, %c0_66, %c0_67], %94 {strides = array<i32>} : memref<1x1x1xf32, #tpu.memory_space<vmem>>, vector<1x1x1xf32>,
    } else {
    }
    %c0 = arith.constant 0 : index
    %c0_1 = arith.constant 0 : index
    %3 = vector.load %arg3[%c0, %c0_1] : memref<7x128xf32, #tpu.memory_space<vmem>>, vector<7x128xf32>
    %c0_2 = arith.constant 0 : index
    %c0_3 = arith.constant 0 : index
    %4 = vector.load %arg4[%c0_2, %c0_3] : memref<32x128xf32, #tpu.memory_space<vmem>>, vector<32x128xf32>
    %c0_4 = arith.constant 0 : index
    %c0_5 = arith.constant 0 : index
    %5 = vector.load %arg5[%c0_4, %c0_5] : memref<32x128xf32, #tpu.memory_space<vmem>>, vector<32x128xf32>
    %c0_6 = arith.constant 0 : index
    %c0_7 = arith.constant 0 : index
    %6 = vector.load %arg2[%c0_6, %c0_7] : memref<1x128xi32, #tpu.memory_space<vmem>>, vector<1x128xi32>
    %c0_i32_8 = arith.constant 0 : i32
    %7 = vector.broadcast %c0_i32_8 : i32 to vector<1x128xi32>
    %8 = arith.cmpi sge, %6, %7 : vector<1x128xi32>
    %9 = arith.extui %8 : vector<1x128xi1> to vector<1x128xi32>
    %10 = arith.sitofp %9 : vector<1x128xi32> to vector<1x128xf32>
    %11 = tpu.iota {dimensions = array<i32: 0>} : vector<7x128xi32>
    %12 = vector.broadcast %6 : vector<1x128xi32> to vector<7x128xi32>
    %13 = arith.cmpi eq, %11, %12 : vector<7x128xi32>
    %14 = arith.extui %13 : vector<7x128xi1> to vector<7x128xi32>
    %15 = arith.sitofp %14 : vector<7x128xi32> to vector<7x128xf32>
    %cst = arith.constant dense<0xFF800000> : vector<128xf32>
    %16 = vector.multi_reduction <maximumf>, %3, %cst [0] : vector<7x128xf32> to vector<128xf32>
    %17 = vector.shape_cast %16 : vector<128xf32> to vector<1x128xf32>
    %18 = vector.broadcast %17 : vector<1x128xf32> to vector<7x128xf32>
    %19 = arith.subf %3, %18 : vector<7x128xf32>
    %20 = math.exp %19 : vector<7x128xf32>
    %cst_9 = arith.constant dense<0.000000e+00> : vector<128xf32>
    %21 = vector.multi_reduction <add>, %20, %cst_9 [0] : vector<7x128xf32> to vector<128xf32>
    %22 = vector.shape_cast %21 : vector<128xf32> to vector<1x128xf32>
    %23 = math.log %22 : vector<1x128xf32>
    %24 = arith.addf %23, %17 : vector<1x128xf32>
    %25 = arith.mulf %3, %15 : vector<7x128xf32>
    %cst_10 = arith.constant dense<0.000000e+00> : vector<128xf32>
    %26 = vector.multi_reduction <add>, %25, %cst_10 [0] : vector<7x128xf32> to vector<128xf32>
    %27 = vector.shape_cast %26 : vector<128xf32> to vector<1x128xf32>
    %c0_11 = arith.constant 0 : index
    %c0_12 = arith.constant 0 : index
    %c0_13 = arith.constant 0 : index
    %28 = vector.load %arg8[%c0_11, %c0_12, %c0_13] : memref<1x1x1xf32, #tpu.memory_space<vmem>>, vector<1x1x1xf32>
    %29 = vector.shape_cast %28 : vector<1x1x1xf32> to vector<1x1xf32>
    %30 = arith.subf %24, %27 : vector<1x128xf32>
    %31 = arith.mulf %30, %10 : vector<1x128xf32>
    %cst_14 = arith.constant dense<0.000000e+00> : vector<1xf32>
    %32 = vector.multi_reduction <add>, %31, %cst_14 [1] : vector<1x128xf32> to vector<1xf32>
    %33 = vector.shape_cast %32 : vector<1xf32> to vector<1x1xf32>
    %34 = arith.addf %29, %33 : vector<1x1xf32>
    %c0_15 = arith.constant 0 : index
    %c0_16 = arith.constant 0 : index
    %c0_17 = arith.constant 0 : index
    %35 = vector.load %arg8[%c0_15, %c0_16, %c0_17] : memref<1x1x1xf32, #tpu.memory_space<vmem>>, vector<1x1x1xf32>
    %36 = vector.shape_cast %35 : vector<1x1x1xf32> to vector<1x1xf32>
    %37 = vector.shape_cast %34 : vector<1x1xf32> to vector<1x1x1xf32>
    tpu.vector_store %arg8[%c0_15, %c0_16, %c0_17], %37 {strides = array<i32>} : memref<1x1x1xf32, #tpu.memory_space<vmem>>, vector<1x1x1xf32>,
    %c0_18 = arith.constant 0 : index
    %c0_19 = arith.constant 0 : index
    %c0_20 = arith.constant 0 : index
    %38 = vector.load %arg6[%c0_18, %c0_19, %c0_20] : memref<1x7x32xf32, #tpu.memory_space<vmem>>, vector<1x7x32xf32>
    %39 = vector.shape_cast %38 : vector<1x7x32xf32> to vector<7x32xf32>
    %cst_21 = arith.constant dense<0.000000e+00> : vector<7x32xf32>
    %40 = tpu.matmul %15, %4, %cst_21 {dimension_numbers = #tpu.dot_dimension_numbers<[1], [1], [0], [0], [0, 0, 1, 0], [], []>} : vector<7x128xf32>, vector<32x128xf32>, vector<7x32xf32> -> vector<7x32xf32>
    %41 = arith.addf %39, %40 : vector<7x32xf32>
    %c0_22 = arith.constant 0 : index
    %c0_23 = arith.constant 0 : index
    %c0_24 = arith.constant 0 : index
    %42 = vector.load %arg6[%c0_22, %c0_23, %c0_24] : memref<1x7x32xf32, #tpu.memory_space<vmem>>, vector<1x7x32xf32>
    %43 = vector.shape_cast %42 : vector<1x7x32xf32> to vector<7x32xf32>
    %44 = vector.shape_cast %41 : vector<7x32xf32> to vector<1x7x32xf32>
    tpu.vector_store %arg6[%c0_22, %c0_23, %c0_24], %44 {strides = array<i32>} : memref<1x7x32xf32, #tpu.memory_space<vmem>>, vector<1x7x32xf32>,
    %c0_25 = arith.constant 0 : index
    %c0_26 = arith.constant 0 : index
    %c0_27 = arith.constant 0 : index
    %45 = vector.load %arg7[%c0_25, %c0_26, %c0_27] : memref<1x7x1xf32, #tpu.memory_space<vmem>>, vector<1x7x1xf32>
    %46 = vector.shape_cast %45 : vector<1x7x1xf32> to vector<7x1xf32>
    %cst_28 = arith.constant dense<0.000000e+00> : vector<7xf32>
    %47 = vector.multi_reduction <add>, %15, %cst_28 [1] : vector<7x128xf32> to vector<7xf32>
    %48 = vector.shape_cast %47 : vector<7xf32> to vector<7x1xf32>
    %49 = arith.addf %46, %48 : vector<7x1xf32>
    %c0_29 = arith.constant 0 : index
    %c0_30 = arith.constant 0 : index
    %c0_31 = arith.constant 0 : index
    %50 = vector.load %arg7[%c0_29, %c0_30, %c0_31] : memref<1x7x1xf32, #tpu.memory_space<vmem>>, vector<1x7x1xf32>
    %51 = vector.shape_cast %50 : vector<1x7x1xf32> to vector<7x1xf32>
    %52 = vector.shape_cast %49 : vector<7x1xf32> to vector<1x7x1xf32>
    tpu.vector_store %arg7[%c0_29, %c0_30, %c0_31], %52 {strides = array<i32>} : memref<1x7x1xf32, #tpu.memory_space<vmem>>, vector<1x7x1xf32>,
    %c0_32 = arith.constant 0 : index
    %c0_33 = arith.constant 0 : index
    %c0_34 = arith.constant 0 : index
    %53 = vector.load %arg9[%c0_32, %c0_33, %c0_34] : memref<1x1x1xf32, #tpu.memory_space<vmem>>, vector<1x1x1xf32>
    %54 = vector.shape_cast %53 : vector<1x1x1xf32> to vector<1x1xf32>
    %55 = arith.mulf %4, %4 : vector<32x128xf32>
    %cst_35 = arith.constant dense<0.000000e+00> : vector<32xf32>
    %56 = vector.multi_reduction <add>, %55, %cst_35 [1] : vector<32x128xf32> to vector<32xf32>
    %57 = vector.shape_cast %56 : vector<32xf32> to vector<32x1xf32>
    %cst_36 = arith.constant dense<0.000000e+00> : vector<1xf32>
    %58 = vector.multi_reduction <add>, %57, %cst_36 [0] : vector<32x1xf32> to vector<1xf32>
    %59 = vector.shape_cast %58 : vector<1xf32> to vector<1x1xf32>
    %60 = arith.addf %54, %59 : vector<1x1xf32>
    %c0_37 = arith.constant 0 : index
    %c0_38 = arith.constant 0 : index
    %c0_39 = arith.constant 0 : index
    %61 = vector.load %arg9[%c0_37, %c0_38, %c0_39] : memref<1x1x1xf32, #tpu.memory_space<vmem>>, vector<1x1x1xf32>
    %62 = vector.shape_cast %61 : vector<1x1x1xf32> to vector<1x1xf32>
    %63 = vector.shape_cast %60 : vector<1x1xf32> to vector<1x1x1xf32>
    tpu.vector_store %arg9[%c0_37, %c0_38, %c0_39], %63 {strides = array<i32>} : memref<1x1x1xf32, #tpu.memory_space<vmem>>, vector<1x1x1xf32>,
    %c0_40 = arith.constant 0 : index
    %c0_41 = arith.constant 0 : index
    %c0_42 = arith.constant 0 : index
    %64 = vector.load %arg10[%c0_40, %c0_41, %c0_42] : memref<1x1x1xf32, #tpu.memory_space<vmem>>, vector<1x1x1xf32>
    %65 = vector.shape_cast %64 : vector<1x1x1xf32> to vector<1x1xf32>
    %66 = math.absf %5 : vector<32x128xf32>
    %cst_43 = arith.constant dense<0.000000e+00> : vector<32xf32>
    %67 = vector.multi_reduction <add>, %66, %cst_43 [1] : vector<32x128xf32> to vector<32xf32>
    %68 = vector.shape_cast %67 : vector<32xf32> to vector<32x1xf32>
    %cst_44 = arith.constant dense<0.000000e+00> : vector<1xf32>
    %69 = vector.multi_reduction <add>, %68, %cst_44 [0] : vector<32x1xf32> to vector<1xf32>
    %70 = vector.shape_cast %69 : vector<1xf32> to vector<1x1xf32>
    %71 = arith.addf %65, %70 : vector<1x1xf32>
    %c0_45 = arith.constant 0 : index
    %c0_46 = arith.constant 0 : index
    %c0_47 = arith.constant 0 : index
    %72 = vector.load %arg10[%c0_45, %c0_46, %c0_47] : memref<1x1x1xf32, #tpu.memory_space<vmem>>, vector<1x1x1xf32>
    %73 = vector.shape_cast %72 : vector<1x1x1xf32> to vector<1x1xf32>
    %74 = vector.shape_cast %71 : vector<1x1xf32> to vector<1x1x1xf32>
    tpu.vector_store %arg10[%c0_45, %c0_46, %c0_47], %74 {strides = array<i32>} : memref<1x1x1xf32, #tpu.memory_space<vmem>>, vector<1x1x1xf32>,
    return
  }
  func.func @transform_0(%arg0: i32, %arg1: i32) -> (i32, i32) {
    %c1_i32 = arith.constant 1 : i32
    %0 = arith.muli %arg0, %c1_i32 : i32
    %1 = arith.addi %0, %arg1 : i32
    %c0_i32 = arith.constant 0 : i32
    %c0_i32_0 = arith.constant 0 : i32
    return %c0_i32, %1 : i32, i32
  }
  func.func @transform_1(%arg0: i32, %arg1: i32) -> (i32, i32) {
    %c1_i32 = arith.constant 1 : i32
    %0 = arith.muli %arg0, %c1_i32 : i32
    %1 = arith.addi %0, %arg1 : i32
    %c0_i32 = arith.constant 0 : i32
    %c0_i32_0 = arith.constant 0 : i32
    return %c0_i32, %1 : i32, i32
  }
  func.func @transform_2(%arg0: i32, %arg1: i32) -> (i32, i32) {
    %c1_i32 = arith.constant 1 : i32
    %0 = arith.muli %arg0, %c1_i32 : i32
    %1 = arith.addi %0, %arg1 : i32
    %c0_i32 = arith.constant 0 : i32
    %c0_i32_0 = arith.constant 0 : i32
    return %c0_i32, %1 : i32, i32
  }
  func.func @transform_3(%arg0: i32, %arg1: i32) -> (i32, i32) {
    %c1_i32 = arith.constant 1 : i32
    %0 = arith.muli %arg0, %c1_i32 : i32
    %1 = arith.addi %0, %arg1 : i32
    %c0_i32 = arith.constant 0 : i32
    %c0_i32_0 = arith.constant 0 : i32
    return %c0_i32, %1 : i32, i32
  }
  func.func @transform_4(%arg0: i32, %arg1: i32) -> (i32, i32, i32) {
    %c0_i32 = arith.constant 0 : i32
    %c0_i32_0 = arith.constant 0 : i32
    %c0_i32_1 = arith.constant 0 : i32
    return %arg0, %c0_i32, %c0_i32_0 : i32, i32, i32
  }
  func.func @transform_5(%arg0: i32, %arg1: i32) -> (i32, i32, i32) {
    %c0_i32 = arith.constant 0 : i32
    %c0_i32_0 = arith.constant 0 : i32
    %c0_i32_1 = arith.constant 0 : i32
    return %arg0, %c0_i32, %c0_i32_0 : i32, i32, i32
  }
  func.func @transform_6(%arg0: i32, %arg1: i32) -> (i32, i32, i32) {
    %c0_i32 = arith.constant 0 : i32
    %c0_i32_0 = arith.constant 0 : i32
    %c0_i32_1 = arith.constant 0 : i32
    return %arg0, %c0_i32, %c0_i32_0 : i32, i32, i32
  }
  func.func @transform_7(%arg0: i32, %arg1: i32) -> (i32, i32, i32) {
    %c0_i32 = arith.constant 0 : i32
    %c0_i32_0 = arith.constant 0 : i32
    %c0_i32_1 = arith.constant 0 : i32
    return %arg0, %c0_i32, %c0_i32_0 : i32, i32, i32
  }
  func.func @transform_8(%arg0: i32, %arg1: i32) -> (i32, i32, i32) {
    %c0_i32 = arith.constant 0 : i32
    %c0_i32_0 = arith.constant 0 : i32
    %c0_i32_1 = arith.constant 0 : i32
    return %arg0, %c0_i32, %c0_i32_0 : i32, i32, i32
  }
}

</mosaic_0001>

<llo_original>
// kernel: tpu_custom_call.1
$region0: #{tpu_custom_call.1}
  #allocation0 [shape = 'u32[]', space=smem, size = 0x4, offset = 0x4, fixed_abs, tag = 'smem constant byte address 0x4 - core index']
  #allocation1 [shape = 'u32[144,128]{1,0:T(1,128)}', space=vmem, size = 0x12000, scoped, tag = 'internal scratch']
  %s0 = inlined_call_operand.hbm [shape: s32[1,128], index: 0, kind: input, shape index: {}]
  %s1 = inlined_call_operand.hbm [shape: f32[7,128], index: 1, kind: input, shape index: {}]
  %s2 = inlined_call_operand.hbm [shape: f32[32,128], index: 2, kind: input, shape index: {}]
  %s3 = inlined_call_operand.hbm [shape: f32[32,128], index: 3, kind: input, shape index: {}]
  %s4 = inlined_call_operand.vmem [shape: f32[1,7,32], index: 4, kind: output, shape index: {0}]
  %s5 = inlined_call_operand.vmem [shape: f32[1,7,1], index: 5, kind: output, shape index: {1}]
  %s6 = inlined_call_operand.hbm [shape: f32[1,1,1], index: 6, kind: output, shape index: {2}]
  %s7 = inlined_call_operand.hbm [shape: f32[1,1,1], index: 7, kind: output, shape index: {3}]
  %s8 = inlined_call_operand.hbm [shape: f32[1,1,1], index: 8, kind: output, shape index: {4}]
  %9 = xla_tuple %s4, %s5, %s6, %s7, %s8
  %s10 = sld [smem:[#allocation0]]
  $region78: #{tpu_custom_call.1} parent=0
    _
  %s12 = ssub.s32 1, %s10
  %s13 = scalar_select 0, %s12, %s10
  $region1: #{tpu_custom_call.1} parent=0
    #allocation2 [shape = 'u8[512]{0}', space=vmem, size = 0x400, scoped, tag = 'input window, operand 0, single buffered']
    #allocation3 [shape = 's32[1]{0}', space=sflag, size = 0x4, scoped, tag = 'scoped memory for tpu_custom_call.1']
    #allocation4 [shape = 's32[1]{0}', space=sflag, size = 0x4, scoped, tag = 'scoped memory for tpu_custom_call.1']
    #allocation5 [shape = 'u8[4096]{0}', space=vmem, size = 0x1000, scoped, tag = 'input window, operand 1, single buffered']
    #allocation6 [shape = 's32[1]{0}', space=sflag, size = 0x4, scoped, tag = 'scoped memory for tpu_custom_call.1']
    #allocation7 [shape = 'u8[16384]{0}', space=vmem, size = 0x4000, scoped, tag = 'input window, operand 2, single buffered']
    #allocation8 [shape = 'u8[16384]{0}', space=vmem, size = 0x4000, scoped, tag = 'input window, operand 3, single buffered']
    #allocation9 [shape = 's32[1]{0}', space=sflag, size = 0x4, scoped, tag = 'scoped memory for tpu_custom_call.1']
    #allocation10 [shape = 'u8[512]{0}', space=vmem, size = 0x400, scoped, tag = 'output window, operand 2, single buffered']
    #allocation11 [shape = 'u8[512]{0}', space=vmem, size = 0x400, scoped, tag = 'output window, operand 3, single buffered']
    #allocation12 [shape = 's32[1]{0}', space=sflag, size = 0x4, scoped, tag = 'scoped memory for tpu_custom_call.1']
    #allocation13 [shape = 'u8[512]{0}', space=vmem, size = 0x400, scoped, tag = 'output window, operand 4, single buffered']
    %14 = vsyncpa [#allocation3], 0
    %15 = vsyncpa [#allocation6], 0
    %16 = vsyncpa [#allocation9], 0
    %17 = vsyncpa [#allocation4], 0
    %18 = vsyncpa [#allocation12], 0
    // Predicated region
    $region2: #{tpu_custom_call.1} parent=1 // pred_check
      _
    $region3: #{tpu_custom_call.1} parent=1 // pred_check_branch
      %20 = sbr.rel (0) target = $region5
    $region4: #{tpu_custom_call.1} parent=1 // pred_region
      %s21 = sadd.s32 0, 0
      %s23 = ssub.s32 16, 16
      %24 = vsyncadd [#allocation3], %s23
      %s25 = smul.addr %s21, 16
      %s26 = scalar_lea.hbm %s0, %s25
      %s28 = sshll.u32 [#allocation2], 4
      %s29 = int_to_ptr.vmem [resolvable:$true] %s28
      %31 = dma.hbm_to_vmem [thread:$0]  %s26, 16, %s29, [#allocation3]
    $region5: #{tpu_custom_call.1} parent=1 // pred_fallthru
      _
    // Predicated region
    $region6: #{tpu_custom_call.1} parent=1 // pred_check
      _
    $region7: #{tpu_custom_call.1} parent=1 // pred_check_branch
      %33 = sbr.rel (0) target = $region9
    $region8: #{tpu_custom_call.1} parent=1 // pred_region
      %s34 = sadd.s32 0, 0
      %s36 = ssub.s32 128, 128
      %37 = vsyncadd [#allocation6], %s36
      %s38 = smul.addr %s34, 128
      %s39 = scalar_lea.hbm %s1, %s38
      %s41 = sshll.u32 [#allocation5], 4
      %s42 = int_to_ptr.vmem [resolvable:$true] %s41
      %44 = dma.hbm_to_vmem [thread:$0]  %s39, 128, %s42, [#allocation6]
    $region9: #{tpu_custom_call.1} parent=1 // pred_fallthru
      _
    // Predicated region
    $region10: #{tpu_custom_call.1} parent=1 // pred_check
      _
    $region11: #{tpu_custom_call.1} parent=1 // pred_check_branch
      %46 = sbr.rel (0) target = $region13
    $region12: #{tpu_custom_call.1} parent=1 // pred_region
      %s47 = sadd.s32 0, 0
      %s49 = ssub.s32 512, 512
      %50 = vsyncadd [#allocation6], %s49
      %s51 = smul.addr %s47, 128
      %s52 = scalar_lea.hbm %s2, %s51
      %s53 = sshll.u32 [#allocation7], 4
      %s54 = int_to_ptr.vmem [resolvable:$true] %s53
      %59 = dma.hbm_to_vmem [thread:$0]  %s52, 512, %s54, [#allocation6], 128, 128, 8
    $region13: #{tpu_custom_call.1} parent=1 // pred_fallthru
      _
    // Predicated region
    $region14: #{tpu_custom_call.1} parent=1 // pred_check
      _
    $region15: #{tpu_custom_call.1} parent=1 // pred_check_branch
      %61 = sbr.rel (0) target = $region17
    $region16: #{tpu_custom_call.1} parent=1 // pred_region
      %s62 = sadd.s32 0, 0
      %s64 = ssub.s32 512, 512
      %65 = vsyncadd [#allocation9], %s64
      %s66 = smul.addr %s62, 128
      %s67 = scalar_lea.hbm %s3, %s66
      %s68 = sshll.u32 [#allocation8], 4
      %s69 = int_to_ptr.vmem [resolvable:$true] %s68
      %74 = dma.hbm_to_vmem [thread:$0]  %s67, 512, %s69, [#allocation9], 128, 128, 8
    $region17: #{tpu_custom_call.1} parent=1 // pred_fallthru
      _
    // Predicated region
    $region18: #{tpu_custom_call.1} parent=1 // pred_check
      _
    $region19: #{tpu_custom_call.1} parent=1 // pred_check_branch
      %76 = sbr.rel (0) target = $region21
    $region20: #{tpu_custom_call.1} parent=1 // pred_region
      %77 = dma.done [#allocation3], 16
    $region21: #{tpu_custom_call.1} parent=1 // pred_fallthru
      _
    // Predicated region
    $region22: #{tpu_custom_call.1} parent=1 // pred_check
      _
    $region23: #{tpu_custom_call.1} parent=1 // pred_check_branch
      %79 = sbr.rel (0) target = $region25
    $region24: #{tpu_custom_call.1} parent=1 // pred_region
      %80 = dma.done [#allocation6], 128
    $region25: #{tpu_custom_call.1} parent=1 // pred_fallthru
      _
    // Predicated region
    $region26: #{tpu_custom_call.1} parent=1 // pred_check
      _
    $region27: #{tpu_custom_call.1} parent=1 // pred_check_branch
      %82 = sbr.rel (0) target = $region29
    $region28: #{tpu_custom_call.1} parent=1 // pred_region
      %83 = dma.done [#allocation6], 512
    $region29: #{tpu_custom_call.1} parent=1 // pred_fallthru
      _
    // Predicated region
    $region30: #{tpu_custom_call.1} parent=1 // pred_check
      _
    $region31: #{tpu_custom_call.1} parent=1 // pred_check_branch
      %85 = sbr.rel (0) target = $region33
    $region32: #{tpu_custom_call.1} parent=1 // pred_region
      %86 = dma.done [#allocation9], 512
    $region33: #{tpu_custom_call.1} parent=1 // pred_fallthru
      _
    %s87 = sadd.s32 0, 0
    %s88 = sadd.s32 0, 0
    %s89 = sadd.s32 0, 0
    %s90 = sadd.s32 0, 0
    %p91 = scmp.eq.s32.totalorder 0, 0
    // Predicated region
    $region34: #{tpu_custom_call.1} parent=1 // pred_check
      %p92 = pneg %p91
    $region35: #{tpu_custom_call.1} parent=1 // pred_check_branch
      %94 = sbr.rel (%p92) target = $region37
    $region36: #{tpu_custom_call.1} parent=1 // pred_region
      %vm95 = vcmask 260096
      %96 = vst.msk [vmem:[%s4] sm:$0x7f] %vm95, 0.0
      %vm97 = vcmask 6144
      %98 = vst.msk [vmem:[%s5] sm:$0x7f] %vm97, 0.0
      %vm99 = vcmask 0
      %100 = vst.msk [vmem:[#allocation10] sm:$0x1] %vm99, 0.0
      %101 = vst.msk [vmem:[#allocation11] sm:$0x1] %vm99, 0.0
      %102 = vst.msk [vmem:[#allocation13] sm:$0x1] %vm99, 0.0
    $region37: #{tpu_custom_call.1} parent=1 // pred_fallthru
      _
    %v103 = vld [vmem:[#allocation5] sm:$0x7f]
    %v104 = vld [vmem:[#allocation7] sm:$0xff]
    %v105 = vld [vmem:[#allocation7 + $0x8] sm:$0xff]
    %v106 = vld [vmem:[#allocation7 + $0x10] sm:$0xff]
    %v107 = vld [vmem:[#allocation7 + $0x18] sm:$0xff]
    %v108 = vld [vmem:[#allocation8] sm:$0xff]
    %v109 = vld [vmem:[#allocation8 + $0x8] sm:$0xff]
    %v110 = vld [vmem:[#allocation8 + $0x10] sm:$0xff]
    %v111 = vld [vmem:[#allocation8 + $0x18] sm:$0xff]
    %v112 = vld [vmem:[#allocation2] sm:$0x1]
    %vm113 = vcmp.ge.s32.totalorder %v112, 0
    %v114 = vsel %vm113, 1, 0
    %v115 = vcvt.s32.f32 %v114
    %v116 = vlaneseq
    %v117 = vshrl.u32 %v116, 7
    %v118 = vlaneseq
    %v119 = vshrl.u32 %v118, 7
    %v120 = vsub.s32 0, %v119
    %v121 = vrot.slane %v112, %v120
    %vm122 = vcmp.eq.s32.totalorder %v117, %v121
    %v123 = vsel %vm122, 1, 0
    %v124 = vcvt.s32.f32 %v123
    %vm125 = vcmask 1046528
    %v126 = vsel %vm125, %v103, -inf
    %v127 = vrot.slane %v126, 4
    %v128 = vmax.f32 %v126, %v127
    %v129 = vrot.slane %v128, 2
    %v130 = vmax.f32 %v128, %v129
    %v131 = vrot.slane %v130, 1
    %v132 = vmax.f32 %v130, %v131
    %v133 = vsub.f32 %v103, %v132
    %v134 = vmul.f32 %v133, 1.442695
    %v135 = vpow.pop %v134
    %v136 = vsel %vm125, %v135, 0.0
    %v137 = vrot.slane %v136, 4
    %v138 = vadd.f32 %v136, %v137
    %v139 = vrot.slane %v138, 2
    %v140 = vadd.f32 %v138, %v139
    %v141 = vrot.slane %v140, 1
    %v142 = vadd.f32 %v140, %v141
    %v143 = vlog2.pop %v142
    %v144 = vmul.f32 %v143, 0.6931472
    %v145 = vadd.f32 %v144, %v132
    %v146 = vmul.f32 %v103, %v124
    %v147 = vsel %vm125, %v146, 0.0
    %v148 = vrot.slane %v147, 4
    %v149 = vadd.f32 %v147, %v148
    %v150 = vrot.slane %v149, 2
    %v151 = vadd.f32 %v149, %v150
    %v152 = vrot.slane %v151, 1
    %v153 = vadd.f32 %v151, %v152
    %v154 = vld [vmem:[#allocation10] sm:$0x1]
    %v155 = vsub.f32 %v145, %v153
    %v156 = vmul.f32 %v155, %v115
    %vm157 = vcmask 1040384
    %v158 = vsel %vm157, %v156, 0.0
    %159 = vadd.xlane.f32.xlu0 %v158
    %v160 = vpop.xlane.xlu0 %159
    %v161 = vadd.f32 %v154, %v160
    %vm162 = vcmask 0
    %163 = vst.msk [vmem:[#allocation10] sm:$0x1] %vm162, %v161
    %v164 = vld [vmem:[%s4] sm:$0x7f]
    %165 = vmatprep.subr.mxu0 0.0
    %166 = vmatpush1.xpose.msra.mxu0 %v104
    %167 = vmatprep.subr.mxu0 0.0
    %168 = vmatpush1.xpose.msra.mxu0 %v105
    %169 = vmatprep.subr.mxu0 0.0
    %170 = vmatpush1.xpose.msra.mxu0 %v106
    %171 = vmatprep.subr.mxu0 0.0
    %172 = vmatpush1.xpose.msra.mxu0 %v107
    %173 = vmatprep.subr.mxu0 0.0
    %174 = vmatpush1.xpose.msra.mxu0 0.0
    %175 = vmatprep.subr.mxu0 0.0
    %176 = vmatpush1.xpose.msra.mxu0 0.0
    %177 = vmatprep.subr.mxu0 0.0
    %178 = vmatpush1.xpose.msra.mxu0 0.0
    %179 = vmatprep.subr.mxu0 0.0
    %180 = vmatpush1.xpose.msra.mxu0 0.0
    %181 = vmatprep.subr.mxu0 0.0
    %182 = vmatpush1.xpose.msra.mxu0 0.0
    %183 = vmatprep.subr.mxu0 0.0
    %184 = vmatpush1.xpose.msra.mxu0 0.0
    %185 = vmatprep.subr.mxu0 0.0
    %186 = vmatpush1.xpose.msra.mxu0 0.0
    %187 = vmatprep.subr.mxu0 0.0
    %188 = vmatpush1.xpose.msra.mxu0 0.0
    %189 = vmatprep.subr.mxu0 0.0
    %190 = vmatpush1.xpose.msra.mxu0 0.0
    %191 = vmatprep.subr.mxu0 0.0
    %192 = vmatpush1.xpose.msra.mxu0 0.0
    %193 = vmatprep.subr.mxu0 0.0
    %194 = vmatpush1.xpose.msra.mxu0 0.0
    %195 = vmatprep.subr.mxu0 0.0
    %196 = vmatpush1.xpose.msra.mxu0 0.0
    %197 = vmatprep.subr.mxu0 0.0
    %198 = vmatpush1.xpose.msra.mxu0 0.0
    %199 = vmatprep.subr.mxu0 0.0
    %200 = vmatpush1.xpose.msra.mxu0 0.0
    %201 = vmatprep.subr.mxu0 0.0
    %202 = vmatpush1.xpose.msra.mxu0 0.0
    %203 = vmatprep.subr.mxu0 0.0
    %204 = vmatpush1.xpose.msra.mxu0 0.0
    %205 = vmatprep.subr.mxu0 0.0
    %206 = vmatpush1.xpose.msra.mxu0 0.0
    %207 = vmatprep.subr.mxu0 0.0
    %208 = vmatpush1.xpose.msra.mxu0 0.0
    %209 = vmatprep.subr.mxu0 0.0
    %210 = vmatpush1.xpose.msra.mxu0 0.0
    %211 = vmatprep.subr.mxu0 0.0
    %212 = vmatpush1.xpose.msra.mxu0 0.0
    %213 = vmatprep.subr.mxu0 0.0
    %214 = vmatpush1.xpose.msra.mxu0 0.0
    %215 = vmatprep.subr.mxu0 0.0
    %216 = vmatpush1.xpose.msra.mxu0 0.0
    %217 = vmatprep.subr.mxu0 0.0
    %218 = vmatpush1.xpose.msra.mxu0 0.0
    %219 = vmatprep.subr.mxu0 0.0
    %220 = vmatpush1.xpose.msra.mxu0 0.0
    %221 = vmatprep.subr.mxu0 0.0
    %222 = vmatpush1.xpose.msra.mxu0 0.0
    %223 = vmatprep.subr.mxu0 0.0
    %224 = vmatpush1.xpose.msra.mxu0 0.0
    %225 = vmatprep.subr.mxu0 0.0
    %226 = vmatpush1.xpose.msra.mxu0 0.0
    %227 = vmatprep.subr.mxu0 0.0
    %228 = vmatpush1.xpose.msra.mxu0 0.0
    %229 = vmatprep.mubr.f32.mxu0 0.0
    %230 = vmatmul.mubr.f32.gmra.mrb[0].mxu0 %v124
    %v231 = vpop.f32.mrb[0].mxu0
    %v232 = vadd.f32 0.0, %v231
    %v233 = vpop.f32.mrb[0].mxu0
    %234 = vdwg.mxu0
    %v235 = vadd.f32 %v164, %v232
    %vm236 = vcmask 260096
    %237 = vst.msk [vmem:[%s4] sm:$0x7f] %vm236, %v235
    %v238 = vld [vmem:[%s5] sm:$0x7f]
    %v239 = vsel %vm125, %v124, 0.0
    %240 = vadd.xlane.f32.xlu0 %v239
    %v241 = vpop.xlane.xlu0 %240
    %v242 = vadd.f32 %v238, %v241
    %vm243 = vcmask 6144
    %244 = vst.msk [vmem:[%s5] sm:$0x7f] %vm243, %v242
    %v245 = vld [vmem:[#allocation11] sm:$0x1]
    %v246 = vmul.f32 %v104, %v104
    %v247 = vmul.f32 %v105, %v105
    %v248 = vmul.f32 %v106, %v106
    %v249 = vmul.f32 %v107, %v107
    %250 = vadd.xlane.f32.xlu0 %v246
    %v251 = vpop.xlane.xlu0 %250
    %252 = vadd.xlane.f32.xlu0 %v247
    %v253 = vpop.xlane.xlu0 %252
    %254 = vadd.xlane.f32.xlu0 %v248
    %v255 = vpop.xlane.xlu0 %254
    %256 = vadd.xlane.f32.xlu0 %v249
    %v257 = vpop.xlane.xlu0 %256
    %v258 = vadd.f32 %v251, %v253
    %v259 = vadd.f32 %v258, %v255
    %v260 = vadd.f32 %v259, %v257
    %v261 = vrot.slane %v260, 4
    %v262 = vadd.f32 %v260, %v261
    %v263 = vrot.slane %v262, 2
    %v264 = vadd.f32 %v262, %v263
    %v265 = vrot.slane %v264, 1
    %v266 = vadd.f32 %v264, %v265
    %v267 = vadd.f32 %v245, %v266
    %268 = vst.msk [vmem:[#allocation11] sm:$0x1] %vm162, %v267
    %v269 = vld [vmem:[#allocation13] sm:$0x1]
    %v270 = vand.u32 2147483647, %v108
    %v271 = vand.u32 2147483647, %v109
    %v272 = vand.u32 2147483647, %v110
    %v273 = vand.u32 2147483647, %v111
    %274 = vadd.xlane.f32.xlu0 %v270
    %v275 = vpop.xlane.xlu0 %274
    %276 = vadd.xlane.f32.xlu0 %v271
    %v277 = vpop.xlane.xlu0 %276
    %278 = vadd.xlane.f32.xlu0 %v272
    %v279 = vpop.xlane.xlu0 %278
    %280 = vadd.xlane.f32.xlu0 %v273
    %v281 = vpop.xlane.xlu0 %280
    %v282 = vadd.f32 %v275, %v277
    %v283 = vadd.f32 %v282, %v279
    %v284 = vadd.f32 %v283, %v281
    %v285 = vrot.slane %v284, 4
    %v286 = vadd.f32 %v284, %v285
    %v287 = vrot.slane %v286, 2
    %v288 = vadd.f32 %v286, %v287
    %v289 = vrot.slane %v288, 1
    %v290 = vadd.f32 %v288, %v289
    %v291 = vadd.f32 %v269, %v290
    %292 = vst.msk [vmem:[#allocation13] sm:$0x1] %vm162, %v291
    // Predicated region
    $region38: #{tpu_custom_call.1} parent=1 // pred_check
      _
    $region39: #{tpu_custom_call.1} parent=1 // pred_check_branch
      %294 = sbr.rel (0) target = $region41
    $region40: #{tpu_custom_call.1} parent=1 // pred_region
      _
    $region41: #{tpu_custom_call.1} parent=1 // pred_fallthru
      _
    // Predicated region
    $region42: #{tpu_custom_call.1} parent=1 // pred_check
      _
    $region43: #{tpu_custom_call.1} parent=1 // pred_check_branch
      %296 = sbr.rel (0) target = $region45
    $region44: #{tpu_custom_call.1} parent=1 // pred_region
      _
    $region45: #{tpu_custom_call.1} parent=1 // pred_fallthru
      _
    // Predicated region
    $region46: #{tpu_custom_call.1} parent=1 // pred_check
      _
    $region47: #{tpu_custom_call.1} parent=1 // pred_check_branch
      %298 = sbr.rel (0) target = $region49
    $region48: #{tpu_custom_call.1} parent=1 // pred_region
      %s300 = ssub.s32 16, 16
      %301 = vsyncadd [#allocation4], %s300
      %s303 = sshll.u32 [#allocation10], 4
      %s304 = int_to_ptr.vmem [resolvable:$true] %s303
      %306 = dma.vmem_to_hbm [thread:$0]  %s304, 16, %s6, [#allocation4]
    $region49: #{tpu_custom_call.1} parent=1 // pred_fallthru
      _
    // Predicated region
    $region50: #{tpu_custom_call.1} parent=1 // pred_check
      _
    $region51: #{tpu_custom_call.1} parent=1 // pred_check_branch
      %308 = sbr.rel (0) target = $region53
    $region52: #{tpu_custom_call.1} parent=1 // pred_region
      %s310 = ssub.s32 16, 16
      %311 = vsyncadd [#allocation12], %s310
      %s313 = sshll.u32 [#allocation11], 4
      %s314 = int_to_ptr.vmem [resolvable:$true] %s313
      %316 = dma.vmem_to_hbm [thread:$0]  %s314, 16, %s7, [#allocation12]
    $region53: #{tpu_custom_call.1} parent=1 // pred_fallthru
      _
    // Predicated region
    $region54: #{tpu_custom_call.1} parent=1 // pred_check
      _
    $region55: #{tpu_custom_call.1} parent=1 // pred_check_branch
      %318 = sbr.rel (0) target = $region57
    $region56: #{tpu_custom_call.1} parent=1 // pred_region
      %s320 = ssub.s32 16, 16
      %321 = vsyncadd [#allocation12], %s320
      %s323 = sshll.u32 [#allocation13], 4
      %s324 = int_to_ptr.vmem [resolvable:$true] %s323
      %326 = dma.vmem_to_hbm [thread:$0]  %s324, 16, %s8, [#allocation12]
    $region57: #{tpu_custom_call.1} parent=1 // pred_fallthru
      _
    // Predicated region
    $region58: #{tpu_custom_call.1} parent=1 // pred_check
      _
    $region59: #{tpu_custom_call.1} parent=1 // pred_check_branch
      %328 = sbr.rel (0) target = $region61
    $region60: #{tpu_custom_call.1} parent=1 // pred_region
      _
    $region61: #{tpu_custom_call.1} parent=1 // pred_fallthru
      _
    // Predicated region
    $region62: #{tpu_custom_call.1} parent=1 // pred_check
      _
    $region63: #{tpu_custom_call.1} parent=1 // pred_check_branch
      %330 = sbr.rel (0) target = $region65
    $region64: #{tpu_custom_call.1} parent=1 // pred_region
      _
    $region65: #{tpu_custom_call.1} parent=1 // pred_fallthru
      _
    // Predicated region
    $region66: #{tpu_custom_call.1} parent=1 // pred_check
      _
    $region67: #{tpu_custom_call.1} parent=1 // pred_check_branch
      %332 = sbr.rel (0) target = $region69
    $region68: #{tpu_custom_call.1} parent=1 // pred_region
      %333 = dma.done [#allocation4], 16
    $region69: #{tpu_custom_call.1} parent=1 // pred_fallthru
      _
    // Predicated region
    $region70: #{tpu_custom_call.1} parent=1 // pred_check
      _
    $region71: #{tpu_custom_call.1} parent=1 // pred_check_branch
      %335 = sbr.rel (0) target = $region73
    $region72: #{tpu_custom_call.1} parent=1 // pred_region
      %336 = dma.done [#allocation12], 16
    $region73: #{tpu_custom_call.1} parent=1 // pred_fallthru
      _
    // Predicated region
    $region74: #{tpu_custom_call.1} parent=1 // pred_check
      _
    $region75: #{tpu_custom_call.1} parent=1 // pred_check_branch
      %338 = sbr.rel (0) target = $region77
    $region76: #{tpu_custom_call.1} parent=1 // pred_region
      %339 = dma.done [#allocation12], 16
    $region77: #{tpu_custom_call.1} parent=1 // pred_fallthru
      _
    %340 = vsyncpa [#allocation3], 1
    %341 = vsyncpa [#allocation6], 1
    %342 = vsyncpa [#allocation9], 1
    %343 = vsyncpa [#allocation4], 1
    %344 = vsyncpa [#allocation12], 1

</llo_original>
